<compile_context>
chip_gen: v6e
topology: v6e:2x2x1
jax: 0.10.0
libtpu: 0.0.40
codegen_flags: <defaults>
</compile_context>

<pallas_src>
import functools

import jax
import jax.numpy as jnp
from jax import lax
from jax.experimental import pallas as pl
from jax.experimental.pallas import tpu as pltpu


TILE_B = 8192  # max batch rows per grid step; multiple of 128


def _round_up(x, m):
    return ((x + m - 1) // m) * m


def _mlp_kernel(x_ref, w1_ref, b1_ref, w2_ref, b2_ref, w3_ref, b3_ref, o_ref):
    # x_ref: (tile_b, input_size) in natural (batch, features) layout.
    # The layout flip to (features, batch) happens inside the MXU contraction,
    # so batch rides the lane axis for every intermediate and the output store
    # (1, tile_b) is lane-dense and unmasked except on the final partial tile.
    x = x_ref[...]

    # h1 = w1_eff @ x.T -> (16, tile_b). "2*x - 1" is pre-folded into w1/b1.
    h1 = lax.dot_general(
        w1_ref[...], x, (((1,), (1,)), ((), ())),
        preferred_element_type=jnp.float32) + b1_ref[...]
    h1 = jnp.maximum(h1, 0.0)

    h2 = jnp.dot(w2_ref[...], h1, preferred_element_type=jnp.float32) + b2_ref[...]
    h2 = jnp.maximum(h2, 0.0)

    z = jnp.dot(w3_ref[...], h2, preferred_element_type=jnp.float32) + b3_ref[...]
    o_ref[...] = jax.nn.sigmoid(z)  # exp on EUP; numerically stable


@functools.partial(jax.jit, static_argnames=("tile_b",))
def net_forward(x, params, *, tile_b=TILE_B):
    """x: (batch, input_size) float32.
    params: PyTorch-layout dict: w1 (16,in), b1 (16,), w2 (16,16), b2 (16,),
            w3 (1,16), b3 (1,). Returns (batch, 1) float32."""
    w1, b1 = params["w1"], params["b1"]
    w2, b2 = params["w2"], params["b2"]
    w3, b3 = params["w3"], params["b3"]

    x = x.astype(jnp.float32)
    batch, input_size = x.shape

    # Fold the "2*x - 1" preprocessing into ln1 (mathematically exact):
    #   w1 @ (2x - 1) + b1 == (2*w1) @ x + (b1 - sum_in(w1))
    w1_eff = 2.0 * w1
    b1_eff = b1 - jnp.sum(w1, axis=1)

    # Adaptive batch tile:
    #   - never larger than the (128-rounded) batch -> no wasted DMA/compute
    #     for small batches,
    #   - big (up to TILE_B) to amortize the ~0.35 us per-grid-step overhead,
    #   - split >=2 ways for mid/large single-tile batches so both v7x
    #     TensorCores get work (harmless on single-TC v5e/v6e).
    tb = min(tile_b, _round_up(batch, 128))
    if pl.cdiv(batch, tb) < 2 and batch > 256:
        tb = _round_up(pl.cdiv(batch, 2), 128)
    n_tiles = pl.cdiv(batch, tb)

    # Biases as column vectors so they broadcast along the batch/lane axis.
    b1c = b1_eff.reshape(-1, 1)
    b2c = b2.reshape(-1, 1)
    b3c = b3.reshape(-1, 1)

    def const_spec(shape):  # VMEM-resident across the whole grid
        return pl.BlockSpec(shape, lambda i: (0, 0))

    param_bytes = 4 * (w1.size + b1.size + w2.size + b2.size + w3.size + b3.size)
    cost = pl.CostEstimate(
        flops=2 * batch * (input_size * 16 + 16 * 16 + 16),
        transcendentals=batch,                       # sigmoid exp per output
        bytes_accessed=4 * batch * (input_size + 1) + param_bytes,
    )

    out = pl.pallas_call(
        _mlp_kernel,
        out_shape=jax.ShapeDtypeStruct((1, batch), jnp.float32),
        grid=(n_tiles,),
        in_specs=[
            # x in natural layout; last dim == full array dim satisfies the
            # (8,128) rule, and the final partial batch tile relies on Pallas
            # edge-block masking (no pad buffer is ever materialized).
            pl.BlockSpec((tb, input_size), lambda i: (i, 0)),
            const_spec(w1_eff.shape), const_spec(b1c.shape),
            const_spec(w2.shape),     const_spec(b2c.shape),
            const_spec(w3.shape),     const_spec(b3c.shape),
        ],
        out_specs=pl.BlockSpec((1, tb), lambda i: (0, i)),
        compiler_params=pltpu.CompilerParams(
            dimension_semantics=("parallel",)),
        cost_estimate=cost,
    )(x, w1_eff, b1c, w2, b2c, w3, b3c)

    # Back to the PyTorch-facing (batch, 1) shape (tiny metadata-level flip).
    return out.T


def init_params(key, input_size):
    """Deterministic init mimicking PyTorch nn.Linear defaults.
    Weights in PyTorch (out_features, in_features) layout; biases (out,)."""
    def linear(k, fan_in, fan_out):
        kw, kb = jax.random.split(k)
        bound = 1.0 / jnp.sqrt(fan_in)
        w = jax.random.uniform(kw, (fan_out, fan_in), jnp.float32, -bound, bound)
        b = jax.random.uniform(kb, (fan_out,), jnp.float32, -bound, bound)
        return w, b

    k1, k2, k3 = jax.random.split(key, 3)
    w1, b1 = linear(k1, input_size, 16)
    w2, b2 = linear(k2, 16, 16)
    w3, b3 = linear(k3, 16, 1)
    return {"w1": w1, "b1": b1, "w2": w2, "b2": b2, "w3": w3, "b3": b3}


if __name__ == "__main__":
    key = jax.random.PRNGKey(0)
    k_params, k_x = jax.random.split(key)

    batch, input_size = 8, 32
    params = init_params(k_params, input_size)
    x = jax.random.uniform(k_x, (batch, input_size), jnp.float32)  # values in [0, 1)

    out = net_forward(x, params)
    out = jax.block_until_ready(out)

    # Reference in plain JAX (PyTorch-layout math, un-folded preprocessing).
    xr = 2.0 * x - 1.0
    h1 = jnp.maximum(xr @ params["w1"].T + params["b1"], 0.0)
    h2 = jnp.maximum(h1 @ params["w2"].T + params["b2"], 0.0)
    ref = jax.nn.sigmoid(h2 @ params["w3"].T + params["b3"])

    assert out.shape == (batch, 1)
    assert jnp.allclose(out, ref, atol=1e-5), "mismatch vs reference"

    print("KERNEL_OK")
</pallas_src>

<mosaic_0001>
module attributes {stable_mosaic.version = 11 : i64} {
  func.func @_mlp_kernel(%arg0: i32, %arg1: memref<128x32xf32, #tpu.memory_space<vmem>>, %arg2: memref<16x32xf32, #tpu.memory_space<vmem>>, %arg3: memref<16x1xf32, #tpu.memory_space<vmem>>, %arg4: memref<16x16xf32, #tpu.memory_space<vmem>>, %arg5: memref<16x1xf32, #tpu.memory_space<vmem>>, %arg6: memref<1x16xf32, #tpu.memory_space<vmem>>, %arg7: memref<1x1xf32, #tpu.memory_space<vmem>>, %arg8: memref<1x128xf32, #tpu.memory_space<vmem>>) attributes {dimension_semantics = [#tpu.dimension_semantics<parallel>], iteration_bounds = array<i64: 1>, scalar_prefetch = 0 : i64, scratch_operands = 0 : i64, tpu.core_type = #tpu.core_type<tc>, window_params = [{transform_indices = @transform_0, window_bounds = array<i64: 128, 32>}, {pipeline_mode = #tpu.pipeline_mode<synchronous>, transform_indices = @transform_1, window_bounds = array<i64: 16, 32>}, {pipeline_mode = #tpu.pipeline_mode<synchronous>, transform_indices = @transform_2, window_bounds = array<i64: 16, 1>}, {pipeline_mode = #tpu.pipeline_mode<synchronous>, transform_indices = @transform_3, window_bounds = array<i64: 16, 16>}, {pipeline_mode = #tpu.pipeline_mode<synchronous>, transform_indices = @transform_4, window_bounds = array<i64: 16, 1>}, {pipeline_mode = #tpu.pipeline_mode<synchronous>, transform_indices = @transform_5, window_bounds = array<i64: 1, 16>}, {pipeline_mode = #tpu.pipeline_mode<synchronous>, transform_indices = @transform_6, window_bounds = array<i64: 1, 1>}, {transform_indices = @transform_7, window_bounds = array<i64: 1, 128>}]} {
    %c0 = arith.constant 0 : index
    %c0_0 = arith.constant 0 : index
    %0 = vector.load %arg1[%c0, %c0_0] : memref<128x32xf32, #tpu.memory_space<vmem>>, vector<128x32xf32>
    %c0_1 = arith.constant 0 : index
    %c0_2 = arith.constant 0 : index
    %1 = vector.load %arg2[%c0_1, %c0_2] : memref<16x32xf32, #tpu.memory_space<vmem>>, vector<16x32xf32>
    %cst = arith.constant dense<0.000000e+00> : vector<16x128xf32>
    %2 = tpu.matmul %1, %0, %cst {dimension_numbers = #tpu.dot_dimension_numbers<[1], [1], [0], [0], [0, 0, 1, 0], [], []>} : vector<16x32xf32>, vector<128x32xf32>, vector<16x128xf32> -> vector<16x128xf32>
    %c0_3 = arith.constant 0 : index
    %c0_4 = arith.constant 0 : index
    %3 = vector.load %arg3[%c0_3, %c0_4] : memref<16x1xf32, #tpu.memory_space<vmem>>, vector<16x1xf32>
    %4 = vector.broadcast %3 : vector<16x1xf32> to vector<16x128xf32>
    %5 = arith.addf %2, %4 : vector<16x128xf32>
    %cst_5 = arith.constant 0.000000e+00 : f32
    %6 = vector.broadcast %cst_5 : f32 to vector<16x128xf32>
    %7 = arith.maximumf %5, %6 : vector<16x128xf32>
    %c0_6 = arith.constant 0 : index
    %c0_7 = arith.constant 0 : index
    %8 = vector.load %arg4[%c0_6, %c0_7] : memref<16x16xf32, #tpu.memory_space<vmem>>, vector<16x16xf32>
    %cst_8 = arith.constant dense<0.000000e+00> : vector<16x128xf32>
    %9 = tpu.matmul %8, %7, %cst_8 {dimension_numbers = #tpu.dot_dimension_numbers<[1], [0], [0], [1], [0, 0, 1, 1], [], []>} : vector<16x16xf32>, vector<16x128xf32>, vector<16x128xf32> -> vector<16x128xf32>
    %c0_9 = arith.constant 0 : index
    %c0_10 = arith.constant 0 : index
    %10 = vector.load %arg5[%c0_9, %c0_10] : memref<16x1xf32, #tpu.memory_space<vmem>>, vector<16x1xf32>
    %11 = vector.broadcast %10 : vector<16x1xf32> to vector<16x128xf32>
    %12 = arith.addf %9, %11 : vector<16x128xf32>
    %cst_11 = arith.constant 0.000000e+00 : f32
    %13 = vector.broadcast %cst_11 : f32 to vector<16x128xf32>
    %14 = arith.maximumf %12, %13 : vector<16x128xf32>
    %c0_12 = arith.constant 0 : index
    %c0_13 = arith.constant 0 : index
    %15 = vector.load %arg6[%c0_12, %c0_13] : memref<1x16xf32, #tpu.memory_space<vmem>>, vector<1x16xf32>
    %cst_14 = arith.constant dense<0.000000e+00> : vector<1x128xf32>
    %16 = tpu.matmul %15, %14, %cst_14 {dimension_numbers = #tpu.dot_dimension_numbers<[1], [0], [0], [1], [0, 0, 1, 1], [], []>} : vector<1x16xf32>, vector<16x128xf32>, vector<1x128xf32> -> vector<1x128xf32>
    %c0_15 = arith.constant 0 : index
    %c0_16 = arith.constant 0 : index
    %17 = vector.load %arg7[%c0_15, %c0_16] : memref<1x1xf32, #tpu.memory_space<vmem>>, vector<1x1xf32>
    %18 = vector.broadcast %17 : vector<1x1xf32> to vector<1x128xf32>
    %19 = arith.addf %16, %18 : vector<1x128xf32>
    %20 = arith.negf %19 : vector<1x128xf32>
    %21 = math.exp %20 : vector<1x128xf32>
    %cst_17 = arith.constant 1.000000e+00 : f32
    %22 = vector.broadcast %cst_17 : f32 to vector<1x128xf32>
    %23 = arith.addf %22, %21 : vector<1x128xf32>
    %24 = arith.divf %22, %23 : vector<1x128xf32>
    %c0_18 = arith.constant 0 : index
    %c0_19 = arith.constant 0 : index
    %25 = vector.load %arg8[%c0_18, %c0_19] : memref<1x128xf32, #tpu.memory_space<vmem>>, vector<1x128xf32>
    tpu.vector_store %arg8[%c0_18, %c0_19], %24 {strides = array<i32>} : memref<1x128xf32, #tpu.memory_space<vmem>>, vector<1x128xf32>,
    return
  }
  func.func @transform_0(%arg0: i32) -> (i32, i32) {
    %c0_i32 = arith.constant 0 : i32
    %c0_i32_0 = arith.constant 0 : i32
    return %arg0, %c0_i32 : i32, i32
  }
  func.func @transform_1(%arg0: i32) -> (i32, i32) {
    %c0_i32 = arith.constant 0 : i32
    %c0_i32_0 = arith.constant 0 : i32
    %c0_i32_1 = arith.constant 0 : i32
    return %c0_i32, %c0_i32_0 : i32, i32
  }
  func.func @transform_2(%arg0: i32) -> (i32, i32) {
    %c0_i32 = arith.constant 0 : i32
    %c0_i32_0 = arith.constant 0 : i32
    %c0_i32_1 = arith.constant 0 : i32
    return %c0_i32, %c0_i32_0 : i32, i32
  }
  func.func @transform_3(%arg0: i32) -> (i32, i32) {
    %c0_i32 = arith.constant 0 : i32
    %c0_i32_0 = arith.constant 0 : i32
    %c0_i32_1 = arith.constant 0 : i32
    return %c0_i32, %c0_i32_0 : i32, i32
  }
  func.func @transform_4(%arg0: i32) -> (i32, i32) {
    %c0_i32 = arith.constant 0 : i32
    %c0_i32_0 = arith.constant 0 : i32
    %c0_i32_1 = arith.constant 0 : i32
    return %c0_i32, %c0_i32_0 : i32, i32
  }
  func.func @transform_5(%arg0: i32) -> (i32, i32) {
    %c0_i32 = arith.constant 0 : i32
    %c0_i32_0 = arith.constant 0 : i32
    %c0_i32_1 = arith.constant 0 : i32
    return %c0_i32, %c0_i32_0 : i32, i32
  }
  func.func @transform_6(%arg0: i32) -> (i32, i32) {
    %c0_i32 = arith.constant 0 : i32
    %c0_i32_0 = arith.constant 0 : i32
    %c0_i32_1 = arith.constant 0 : i32
    return %c0_i32, %c0_i32_0 : i32, i32
  }
  func.func @transform_7(%arg0: i32) -> (i32, i32) {
    %c0_i32 = arith.constant 0 : i32
    %c0_i32_0 = arith.constant 0 : i32
    return %c0_i32, %arg0 : i32, i32
  }
}

</mosaic_0001>

<llo_original>
// kernel: net_forward.1
$region0: #{net_forward.1}
  #allocation0 [shape = 'u32[]', space=smem, size = 0x4, offset = 0x4, fixed_abs, tag = 'smem constant byte address 0x4 - core index']
  #allocation1 [shape = 'u32[144,128]{1,0:T(1,128)}', space=vmem, size = 0x12000, scoped, tag = 'internal scratch']
  #allocation2 [shape = 'f32[1,1]{1,0:T(1,128)S(1)}', space=vmem, size = 0x200, scoped, tag = 'scoped memory for net_forward.1']
  %s0 = inlined_call_operand.vmem [shape: f32[8,32], index: 0, kind: input, shape index: {}]
  %s1 = inlined_call_operand.vmem [shape: f32[16,32], index: 1, kind: input, shape index: {}]
  %s2 = inlined_call_operand.vmem [shape: f32[16,1], index: 2, kind: input, shape index: {}]
  %s3 = inlined_call_operand.vmem [shape: f32[16,16], index: 3, kind: input, shape index: {}]
  %s4 = inlined_call_operand.vmem [shape: f32[16,1], index: 4, kind: input, shape index: {}]
  %s5 = inlined_call_operand.vmem [shape: f32[1,16], index: 5, kind: input, shape index: {}]
  %s6 = inlined_call_operand.<no memory space> [shape: f32[1,1], index: 6, kind: input, shape index: {}]
  %s7 = inlined_call_operand.hbm [shape: f32[1,8], index: 7, kind: output, shape index: {}]
  %s8 = sld [smem:[#allocation0]]
  $region38: #{net_forward.1} parent=0
    _
  %s10 = ssub.s32 1, %s8
  %s11 = scalar_select 0, %s10, %s8
  %v12 = vstv %s6
  %13 = vst [vmem:[#allocation2] sm:$0x1] %v12
  $region1: #{net_forward.1} parent=0
    #allocation3 [shape = 'u8[512]{0}', space=vmem, size = 0x400, scoped, tag = 'output window, operand 0, single buffered']
    #allocation4 [shape = 's32[1]{0}', space=sflag, size = 0x4, scoped, tag = 'scoped memory for net_forward.1']
    %14 = vsyncpa [#allocation4], 0
    // Predicated region
    $region2: #{net_forward.1} parent=1 // pred_check
      _
    $region3: #{net_forward.1} parent=1 // pred_check_branch
      %16 = sbr.rel (0) target = $region5
    $region4: #{net_forward.1} parent=1 // pred_region
      _
    $region5: #{net_forward.1} parent=1 // pred_fallthru
      _
    // Predicated region
    $region6: #{net_forward.1} parent=1 // pred_check
      _
    $region7: #{net_forward.1} parent=1 // pred_check_branch
      %18 = sbr.rel (0) target = $region9
    $region8: #{net_forward.1} parent=1 // pred_region
      _
    $region9: #{net_forward.1} parent=1 // pred_fallthru
      _
    // Predicated region
    $region10: #{net_forward.1} parent=1 // pred_check
      _
    $region11: #{net_forward.1} parent=1 // pred_check_branch
      %20 = sbr.rel (0) target = $region13
    $region12: #{net_forward.1} parent=1 // pred_region
      _
    $region13: #{net_forward.1} parent=1 // pred_fallthru
      _
    // Predicated region
    $region14: #{net_forward.1} parent=1 // pred_check
      _
    $region15: #{net_forward.1} parent=1 // pred_check_branch
      %22 = sbr.rel (0) target = $region17
    $region16: #{net_forward.1} parent=1 // pred_region
      _
    $region17: #{net_forward.1} parent=1 // pred_fallthru
      _
    // Predicated region
    $region18: #{net_forward.1} parent=1 // pred_check
      _
    $region19: #{net_forward.1} parent=1 // pred_check_branch
      %24 = sbr.rel (0) target = $region21
    $region20: #{net_forward.1} parent=1 // pred_region
      _
    $region21: #{net_forward.1} parent=1 // pred_fallthru
      _
    // Predicated region
    $region22: #{net_forward.1} parent=1 // pred_check
      _
    $region23: #{net_forward.1} parent=1 // pred_check_branch
      %26 = sbr.rel (0) target = $region25
    $region24: #{net_forward.1} parent=1 // pred_region
      _
    $region25: #{net_forward.1} parent=1 // pred_fallthru
      _
    // Predicated region
    $region26: #{net_forward.1} parent=1 // pred_check
      _
    $region27: #{net_forward.1} parent=1 // pred_check_branch
      %28 = sbr.rel (0) target = $region29
    $region28: #{net_forward.1} parent=1 // pred_region
      _
    $region29: #{net_forward.1} parent=1 // pred_fallthru
      _
    %v29 = vld [vmem:[%s0] sm:$0xff]
    %v30 = vld [vmem:[%s0 + $0x8] sm:$0xff]
    %v31 = vld [vmem:[%s0 + $0x10] sm:$0xff]
    %v32 = vld [vmem:[%s0 + $0x18] sm:$0xff]
    %v33 = vld [vmem:[%s0 + $0x20] sm:$0xff]
    %v34 = vld [vmem:[%s0 + $0x28] sm:$0xff]
    %v35 = vld [vmem:[%s0 + $0x30] sm:$0xff]
    %v36 = vld [vmem:[%s0 + $0x38] sm:$0xff]
    %v37 = vld [vmem:[%s0 + $0x40] sm:$0xff]
    %v38 = vld [vmem:[%s0 + $0x48] sm:$0xff]
    %v39 = vld [vmem:[%s0 + $0x50] sm:$0xff]
    %v40 = vld [vmem:[%s0 + $0x58] sm:$0xff]
    %v41 = vld [vmem:[%s0 + $0x60] sm:$0xff]
    %v42 = vld [vmem:[%s0 + $0x68] sm:$0xff]
    %v43 = vld [vmem:[%s0 + $0x70] sm:$0xff]
    %v44 = vld [vmem:[%s0 + $0x78] sm:$0xff]
    %v45 = vld [vmem:[%s1] sm:$0xff]
    %v46 = vld [vmem:[%s1 + $0x8] sm:$0xff]
    %v47 = vld [vmem:[%s2] sm:$0xff]
    %v48 = vld [vmem:[%s2 + $0x8] sm:$0xff]
    %50 = vset.pattern.permute.xlu0 0
    %51 = vperm.xlu0 %50, %v47
    %v52 = vpop.permute.xlu0 %51
    %55 = vset.pattern.permute.xlu0 0
    %56 = vperm.xlu0 %55, %v48
    %v57 = vpop.permute.xlu0 %56
    %vm59 = vcmask 261120
    %v61 = vsel %vm59, %v45, 0
    %v64 = vsel %vm59, %v46, 0
    %v67 = vsel %vm59, %v29, 0
    %v70 = vsel %vm59, %v30, 0
    %v73 = vsel %vm59, %v31, 0
    %v76 = vsel %vm59, %v32, 0
    %v79 = vsel %vm59, %v33, 0
    %v82 = vsel %vm59, %v34, 0
    %v85 = vsel %vm59, %v35, 0
    %v88 = vsel %vm59, %v36, 0
    %v91 = vsel %vm59, %v37, 0
    %v94 = vsel %vm59, %v38, 0
    %v97 = vsel %vm59, %v39, 0
    %v100 = vsel %vm59, %v40, 0
    %v103 = vsel %vm59, %v41, 0
    %v106 = vsel %vm59, %v42, 0
    %v109 = vsel %vm59, %v43, 0
    %v112 = vsel %vm59, %v44, 0
    %114 = vmatprep.subr.mxu0 0.0
    %115 = vmatpush1.xpose.msra.mxu0 %v112
    %116 = vmatprep.subr.mxu0 0.0
    %117 = vmatpush1.xpose.msra.mxu0 %v109
    %118 = vmatprep.subr.mxu0 0.0
    %119 = vmatpush1.xpose.msra.mxu0 %v106
    %120 = vmatprep.subr.mxu0 0.0
    %121 = vmatpush1.xpose.msra.mxu0 %v103
    %122 = vmatprep.subr.mxu0 0.0
    %123 = vmatpush1.xpose.msra.mxu0 %v100
    %124 = vmatprep.subr.mxu0 0.0
    %125 = vmatpush1.xpose.msra.mxu0 %v97
    %126 = vmatprep.subr.mxu0 0.0
    %127 = vmatpush1.xpose.msra.mxu0 %v94
    %128 = vmatprep.subr.mxu0 0.0
    %129 = vmatpush1.xpose.msra.mxu0 %v91
    %130 = vmatprep.subr.mxu0 0.0
    %131 = vmatpush1.xpose.msra.mxu0 %v88
    %132 = vmatprep.subr.mxu0 0.0
    %133 = vmatpush1.xpose.msra.mxu0 %v85
    %134 = vmatprep.subr.mxu0 0.0
    %135 = vmatpush1.xpose.msra.mxu0 %v82
    %136 = vmatprep.subr.mxu0 0.0
    %137 = vmatpush1.xpose.msra.mxu0 %v79
    %138 = vmatprep.subr.mxu0 0.0
    %139 = vmatpush1.xpose.msra.mxu0 %v76
    %140 = vmatprep.subr.mxu0 0.0
    %141 = vmatpush1.xpose.msra.mxu0 %v73
    %142 = vmatprep.subr.mxu0 0.0
    %143 = vmatpush1.xpose.msra.mxu0 %v70
    %144 = vmatprep.subr.mxu0 0.0
    %145 = vmatpush1.xpose.msra.mxu0 %v67
    %146 = vmatprep.subr.mxu0 0.0
    %147 = vmatpush2.xpose.msra.mxu0 0.0
    %148 = vmatprep.subr.mxu0 0.0
    %149 = vmatpush2.xpose.msra.mxu0 0.0
    %150 = vmatprep.subr.mxu0 0.0
    %151 = vmatpush2.xpose.msra.mxu0 0.0
    %152 = vmatprep.subr.mxu0 0.0
    %153 = vmatpush2.xpose.msra.mxu0 0.0
    %154 = vmatprep.subr.mxu0 0.0
    %155 = vmatpush2.xpose.msra.mxu0 0.0
    %156 = vmatprep.subr.mxu0 0.0
    %157 = vmatpush2.xpose.msra.mxu0 0.0
    %158 = vmatprep.subr.mxu0 0.0
    %159 = vmatpush2.xpose.msra.mxu0 0.0
    %160 = vmatprep.subr.mxu0 0.0
    %161 = vmatpush2.xpose.msra.mxu0 0.0
    %162 = vmatprep.subr.mxu0 0.0
    %163 = vmatpush2.xpose.msra.mxu0 0.0
    %164 = vmatprep.subr.mxu0 0.0
    %165 = vmatpush2.xpose.msra.mxu0 0.0
    %166 = vmatprep.subr.mxu0 0.0
    %167 = vmatpush2.xpose.msra.mxu0 0.0
    %168 = vmatprep.subr.mxu0 0.0
    %169 = vmatpush2.xpose.msra.mxu0 0.0
    %170 = vmatprep.subr.mxu0 0.0
    %171 = vmatpush2.xpose.msra.mxu0 0.0
    %172 = vmatprep.subr.mxu0 0.0
    %173 = vmatpush2.xpose.msra.mxu0 0.0
    %174 = vmatprep.subr.mxu0 0.0
    %175 = vmatpush2.xpose.msra.mxu0 0.0
    %176 = vmatprep.subr.mxu0 0.0
    %177 = vmatpush2.xpose.msra.mxu0 0.0
    %178 = vmatprep.mubr.f32.mxu0 0.0
    %179 = vmatmul.mubr.f32.gmra.mxu0 %v61
    %v180 = vpop.f32.mrf.mxu0
    %v181 = vadd.f32 %v52, %v180
    %v182 = vpop.f32.mrf.mxu0
    %183 = vmatprep.mubr.f32.mxu0 0.0
    %184 = vmatmul.mubr.f32.gmra.mxu0 %v64
    %v185 = vpop.f32.mrf.mxu0
    %v186 = vadd.f32 %v57, %v185
    %v187 = vpop.f32.mrf.mxu0
    %188 = vdwg.mxu0
    %v189 = vmax.f32 %v181, 0.0
    %v190 = vmax.f32 %v186, 0.0
    %v191 = vld [vmem:[%s3] sm:$0xff]
    %v192 = vld [vmem:[%s3 + $0x8] sm:$0xff]
    %v193 = vld [vmem:[%s4] sm:$0xff]
    %v194 = vld [vmem:[%s4 + $0x8] sm:$0xff]
    %196 = vset.pattern.permute.xlu0 0
    %197 = vperm.xlu0 %196, %v193
    %v198 = vpop.permute.xlu0 %197
    %201 = vset.pattern.permute.xlu0 0
    %202 = vperm.xlu0 %201, %v194
    %v203 = vpop.permute.xlu0 %202
    %vm205 = vcmask 130048
    %v207 = vsel %vm205, %v191, 0
    %v210 = vsel %vm205, %v192, 0
    %212 = vmatprep.subr.mxu0 0.0
    %213 = vmatpush1.msra.mxu0 0.0
    %214 = vmatprep.subr.mxu0 0.0
    %215 = vmatpush1.msra.mxu0 0.0
    %216 = vmatprep.subr.mxu0 0.0
    %217 = vmatpush1.msra.mxu0 0.0
    %218 = vmatprep.subr.mxu0 0.0
    %219 = vmatpush1.msra.mxu0 0.0
    %220 = vmatprep.subr.mxu0 0.0
    %221 = vmatpush1.msra.mxu0 0.0
    %222 = vmatprep.subr.mxu0 0.0
    %223 = vmatpush1.msra.mxu0 0.0
    %224 = vmatprep.subr.mxu0 0.0
    %225 = vmatpush1.msra.mxu0 0.0
    %226 = vmatprep.subr.mxu0 0.0
    %227 = vmatpush1.msra.mxu0 0.0
    %228 = vmatprep.subr.mxu0 0.0
    %229 = vmatpush1.msra.mxu0 0.0
    %230 = vmatprep.subr.mxu0 0.0
    %231 = vmatpush1.msra.mxu0 0.0
    %232 = vmatprep.subr.mxu0 0.0
    %233 = vmatpush1.msra.mxu0 0.0
    %234 = vmatprep.subr.mxu0 0.0
    %235 = vmatpush1.msra.mxu0 0.0
    %236 = vmatprep.subr.mxu0 0.0
    %237 = vmatpush1.msra.mxu0 0.0
    %238 = vmatprep.subr.mxu0 0.0
    %239 = vmatpush1.msra.mxu0 0.0
    %240 = vmatprep.subr.mxu0 0.0
    %241 = vmatpush1.msra.mxu0 %v190
    %242 = vmatprep.subr.mxu0 0.0
    %243 = vmatpush1.msra.mxu0 %v189
    %244 = vmatprep.subr.mxu0 0.0
    %245 = vmatpush2.msra.mxu0 0.0
    %246 = vmatprep.subr.mxu0 0.0
    %247 = vmatpush2.msra.mxu0 0.0
    %248 = vmatprep.subr.mxu0 0.0
    %249 = vmatpush2.msra.mxu0 0.0
    %250 = vmatprep.subr.mxu0 0.0
    %251 = vmatpush2.msra.mxu0 0.0
    %252 = vmatprep.subr.mxu0 0.0
    %253 = vmatpush2.msra.mxu0 0.0
    %254 = vmatprep.subr.mxu0 0.0
    %255 = vmatpush2.msra.mxu0 0.0
    %256 = vmatprep.subr.mxu0 0.0
    %257 = vmatpush2.msra.mxu0 0.0
    %258 = vmatprep.subr.mxu0 0.0
    %259 = vmatpush2.msra.mxu0 0.0
    %260 = vmatprep.subr.mxu0 0.0
    %261 = vmatpush2.msra.mxu0 0.0
    %262 = vmatprep.subr.mxu0 0.0
    %263 = vmatpush2.msra.mxu0 0.0
    %264 = vmatprep.subr.mxu0 0.0
    %265 = vmatpush2.msra.mxu0 0.0
    %266 = vmatprep.subr.mxu0 0.0
    %267 = vmatpush2.msra.mxu0 0.0
    %268 = vmatprep.subr.mxu0 0.0
    %269 = vmatpush2.msra.mxu0 0.0
    %270 = vmatprep.subr.mxu0 0.0
    %271 = vmatpush2.msra.mxu0 0.0
    %272 = vmatprep.subr.mxu0 0.0
    %273 = vmatpush2.msra.mxu0 0.0
    %274 = vmatprep.subr.mxu0 0.0
    %275 = vmatpush2.msra.mxu0 0.0
    %276 = vmatprep.mubr.f32.mxu0 0.0
    %277 = vmatmul.mubr.f32.gmra.mxu0 %v207
    %v278 = vpop.f32.mrf.mxu0
    %v279 = vadd.f32 %v198, %v278
    %v280 = vpop.f32.mrf.mxu0
    %281 = vmatprep.mubr.f32.mxu0 0.0
    %282 = vmatmul.mubr.f32.gmra.mxu0 %v210
    %v283 = vpop.f32.mrf.mxu0
    %v284 = vadd.f32 %v203, %v283
    %v285 = vpop.f32.mrf.mxu0
    %286 = vdwg.mxu0
    %v287 = vmax.f32 %v279, 0.0
    %v288 = vmax.f32 %v284, 0.0
    %v289 = vld [vmem:[%s5] sm:$0x1]
    %v290 = vld [vmem:[#allocation2] sm:$0x1]
    %292 = vset.pattern.permute.xlu0 0
    %293 = vperm.xlu0 %292, %v290
    %v294 = vpop.permute.xlu0 %293
    %v296 = vlaneseq
    %v297 = vshrl.u32 %v296, 7
    %v298 = vsub.s32 0, %v297
    %v299 = vrot.slane %v294, %v298
    %v301 = vsel %vm205, %v289, 0
    %303 = vmatprep.subr.mxu0 0.0
    %304 = vmatpush1.msra.mxu0 0.0
    %305 = vmatprep.subr.mxu0 0.0
    %306 = vmatpush1.msra.mxu0 0.0
    %307 = vmatprep.subr.mxu0 0.0
    %308 = vmatpush1.msra.mxu0 0.0
    %309 = vmatprep.subr.mxu0 0.0
    %310 = vmatpush1.msra.mxu0 0.0
    %311 = vmatprep.subr.mxu0 0.0
    %312 = vmatpush1.msra.mxu0 0.0
    %313 = vmatprep.subr.mxu0 0.0
    %314 = vmatpush1.msra.mxu0 0.0
    %315 = vmatprep.subr.mxu0 0.0
    %316 = vmatpush1.msra.mxu0 0.0
    %317 = vmatprep.subr.mxu0 0.0
    %318 = vmatpush1.msra.mxu0 0.0
    %319 = vmatprep.subr.mxu0 0.0
    %320 = vmatpush1.msra.mxu0 0.0
    %321 = vmatprep.subr.mxu0 0.0
    %322 = vmatpush1.msra.mxu0 0.0
    %323 = vmatprep.subr.mxu0 0.0
    %324 = vmatpush1.msra.mxu0 0.0
    %325 = vmatprep.subr.mxu0 0.0
    %326 = vmatpush1.msra.mxu0 0.0
    %327 = vmatprep.subr.mxu0 0.0
    %328 = vmatpush1.msra.mxu0 0.0
    %329 = vmatprep.subr.mxu0 0.0
    %330 = vmatpush1.msra.mxu0 0.0
    %331 = vmatprep.subr.mxu0 0.0
    %332 = vmatpush1.msra.mxu0 %v288
    %333 = vmatprep.subr.mxu0 0.0
    %334 = vmatpush1.msra.mxu0 %v287
    %335 = vmatprep.subr.mxu0 0.0
    %336 = vmatpush2.msra.mxu0 0.0
    %337 = vmatprep.subr.mxu0 0.0
    %338 = vmatpush2.msra.mxu0 0.0
    %339 = vmatprep.subr.mxu0 0.0
    %340 = vmatpush2.msra.mxu0 0.0
    %341 = vmatprep.subr.mxu0 0.0
    %342 = vmatpush2.msra.mxu0 0.0
    %343 = vmatprep.subr.mxu0 0.0
    %344 = vmatpush2.msra.mxu0 0.0
    %345 = vmatprep.subr.mxu0 0.0
    %346 = vmatpush2.msra.mxu0 0.0
    %347 = vmatprep.subr.mxu0 0.0
    %348 = vmatpush2.msra.mxu0 0.0
    %349 = vmatprep.subr.mxu0 0.0
    %350 = vmatpush2.msra.mxu0 0.0
    %351 = vmatprep.subr.mxu0 0.0
    %352 = vmatpush2.msra.mxu0 0.0
    %353 = vmatprep.subr.mxu0 0.0
    %354 = vmatpush2.msra.mxu0 0.0
    %355 = vmatprep.subr.mxu0 0.0
    %356 = vmatpush2.msra.mxu0 0.0
    %357 = vmatprep.subr.mxu0 0.0
    %358 = vmatpush2.msra.mxu0 0.0
    %359 = vmatprep.subr.mxu0 0.0
    %360 = vmatpush2.msra.mxu0 0.0
    %361 = vmatprep.subr.mxu0 0.0
    %362 = vmatpush2.msra.mxu0 0.0
    %363 = vmatprep.subr.mxu0 0.0
    %364 = vmatpush2.msra.mxu0 0.0
    %365 = vmatprep.subr.mxu0 0.0
    %366 = vmatpush2.msra.mxu0 0.0
    %367 = vmatprep.mubr.f32.mxu0 0.0
    %368 = vmatmul.mubr.f32.gmra.mxu0 %v301
    %v369 = vpop.f32.mrf.mxu0
    %v370 = vadd.f32 %v299, %v369
    %v371 = vpop.f32.mrf.mxu0
    %372 = vdwg.mxu0
    %v373 = vxor.u32 %v370, 2147483648
    %v374 = vmul.f32 %v373, 1.442695
    %v375 = vpow.pop %v374
    %v376 = vadd.f32 %v375, 1.0
    %v377 = vrcp.pop %v376
    %v378 = vmul.f32 1.0, %v377
    %379 = vst [vmem:[#allocation3] sm:$0x1] %v378
    // Predicated region
    $region30: #{net_forward.1} parent=1 // pred_check
      _
    $region31: #{net_forward.1} parent=1 // pred_check_branch
      %381 = sbr.rel (0) target = $region33
    $region32: #{net_forward.1} parent=1 // pred_region
      %s383 = ssub.s32 16, 16
      %384 = vsyncadd [#allocation4], %s383
      %s386 = sshll.u32 [#allocation3], 4
      %s387 = int_to_ptr.vmem [resolvable:$true] %s386
      %389 = dma.vmem_to_hbm [thread:$0]  %s387, 16, %s7, [#allocation4]
    $region33: #{net_forward.1} parent=1 // pred_fallthru
      _
    // Predicated region
    $region34: #{net_forward.1} parent=1 // pred_check
      _
    $region35: #{net_forward.1} parent=1 // pred_check_branch
      %391 = sbr.rel (0) target = $region37
    $region36: #{net_forward.1} parent=1 // pred_region
      %392 = dma.done [#allocation4], 16
    $region37: #{net_forward.1} parent=1 // pred_fallthru
      _
    %393 = vsyncpa [#allocation4], 1

</llo_original>
